<compile_context>
chip_gen: v5e
topology: v5e:2x2
jax: 0.10.0
libtpu: 0.0.40
codegen_flags: <defaults>
</compile_context>

<pallas_src>
import jax
import jax.numpy as jnp
from jax import lax
from jax.experimental import pallas as pl
from jax.experimental.pallas import tpu as pltpu

E = 28 * 28                           # input_size / embed dim (784)
NUM_HEADS = 8
HEAD_DIM = 8                          # hidden_size
HOPFIELD_DIM = NUM_HEADS * HEAD_DIM   # 64
UPDATE_STEPS_MAX = 5                  # retained for spec parity (inert, see header)
SCALING = 0.25                        # retained for spec parity (inert, see header)
LN_EPS = 1e-5


def _round_up(v, m):
    return (v + m - 1) // m * m


def hopfield_kernel(x_ref, wv_ref, wo_ref, bo_ref, out_ref):
    # TODO(synk): hflayers' eps-based data-dependent early-exit over the
    # retrieval updates has no Pallas equivalent; for seq-len 1 the whole
    # q/k retrieval path is provably the identity, so it is omitted (exact).
    x = x_ref[...]                                            # (TN, E) fp32
    mu = jnp.mean(x, axis=-1, keepdims=True)
    c = x - mu
    var = jnp.mean(c * c, axis=-1, keepdims=True)
    # LayerNorm gamma/beta are folded into Wv / the fused output bias outside
    # the kernel, so only the normalization itself remains here.
    normed = (c * lax.rsqrt(var + LN_EPS)).astype(jnp.bfloat16)            # (TN, E)

    # value projection + output projection (bf16 operands, fp32 accumulation)
    v = jnp.dot(normed, wv_ref[...], preferred_element_type=jnp.float32)   # (TN, 64)
    out = jnp.dot(v.astype(jnp.bfloat16), wo_ref[...],
                  preferred_element_type=jnp.float32) + bo_ref[...]        # (TN, E)

    # sigmoid(z) == 0.5*tanh(z/2)+0.5 : a single EUP push per vreg.
    out_ref[...] = 0.5 * jnp.tanh(0.5 * out) + 0.5


def init_params(key):
    ks = jax.random.split(key, 8)

    def nrm(k, shape, std=0.02):
        return (std * jax.random.normal(k, shape)).astype(jnp.float32)

    # Full HopfieldPooling parameter set kept for parity with the PyTorch
    # module's state dict; the forward only consumes the live subset
    # (proj LayerNorm, Wv/bv, Wo/bo) because the q/k path is inert for seq=1.
    return dict(
        pool_w=nrm(ks[0], (1, E)),                   # pooling_weights (inert in forward)
        ln_g=jnp.ones((3, E), jnp.float32),          # LN gammas: stored/state/proj
        ln_b=jnp.zeros((3, E), jnp.float32),
        wq=nrm(ks[1], (E, HOPFIELD_DIM)),            # inert in forward
        wk=nrm(ks[2], (E, HOPFIELD_DIM)),            # inert in forward
        wv=nrm(ks[3], (E, HOPFIELD_DIM)),
        bq=nrm(ks[4], (1, HOPFIELD_DIM)),            # inert in forward
        bk=nrm(ks[5], (1, HOPFIELD_DIM)),            # inert in forward
        bv=nrm(ks[6], (1, HOPFIELD_DIM)),
        wo=nrm(ks[7], (HOPFIELD_DIM, E)),
        bo=jnp.zeros((1, E), jnp.float32),
    )


def hopfield_module_forward(x, p):
    n = x.size // E
    # x.view(-1, 1, 28*28), sequence dim squeezed. Keep fp32 into the kernel:
    # a standalone bf16 cast pass would ADD HBM traffic end-to-end.
    x_flat = x.reshape(n, E).astype(jnp.float32)

    # Fold the proj-LayerNorm affine into the value projection and fold both
    # biases through Wo into one fused output bias (tiny (E,64)/(64,E) host
    # prep; removes per-element VPU work and three operand DMAs per step).
    ln_g = p['ln_g'][2]
    ln_b = p['ln_b'][2]
    wv_f = (ln_g[:, None] * p['wv']).astype(jnp.bfloat16)               # (E, 64)
    wo_f = p['wo'].astype(jnp.bfloat16)                                  # (64, E)
    bo_f = ((ln_b @ p['wv'] + p['bv'][0]) @ p['wo'] + p['bo'][0]).reshape(1, E)

    # Big batch tiles amortize the ~0.35 us/step overhead; cap so the grid has
    # >= 2 steps when possible (two v7x TensorCores). Ragged last block is
    # handled by Pallas (no host-side pad / slice).
    block_n = min(1024, _round_up(pl.cdiv(n, 2), 8))
    grid = (pl.cdiv(n, block_n),)

    batch_spec = pl.BlockSpec((block_n, E), lambda i: (i, 0))

    def full(shape):
        return pl.BlockSpec(shape, lambda i, _nd=len(shape): (0,) * _nd)

    out_flat = pl.pallas_call(
        hopfield_kernel,
        out_shape=jax.ShapeDtypeStruct((n, E), jnp.float32),
        grid=grid,
        in_specs=[
            batch_spec,                        # x (fp32)
            full((E, HOPFIELD_DIM)),           # Wv' = gamma-folded Wv (bf16)
            full((HOPFIELD_DIM, E)),           # Wo (bf16)
            full((1, E)),                      # fused output bias (fp32)
        ],
        out_specs=batch_spec,
        compiler_params=pltpu.CompilerParams(
            dimension_semantics=("parallel",),
            vmem_limit_bytes=48 * 1024 * 1024),
    )(x_flat, wv_f, wo_f, bo_f)

    return out_flat.reshape(-1, 1, 28, 28)     # x.view(-1, 1, 28, 28)


def reference_forward(x, p):
    """Pure-JAX fp32 reference of the same (unreduced, unfolded) forward."""
    n = x.size // E
    xf = x.reshape(n, E).astype(jnp.float32)

    def ln(v, g, b):
        mu = v.mean(-1, keepdims=True)
        var = ((v - mu) ** 2).mean(-1, keepdims=True)
        return (v - mu) / jnp.sqrt(var + LN_EPS) * g + b

    proj = ln(xf, p['ln_g'][2], p['ln_b'][2])
    # seq len 1 -> per-head softmax == 1 for every head -> retrieval output is
    # exactly the value of the single stored pattern (q/k path is inert).
    v = jnp.dot(proj, p['wv'], preferred_element_type=jnp.float32) + p['bv']
    out = jnp.dot(v, p['wo'], preferred_element_type=jnp.float32) + p['bo']
    return jax.nn.sigmoid(out).reshape(-1, 1, 28, 28)


if __name__ == "__main__":
    key = jax.random.PRNGKey(0)
    k_param, k_x, k_g, k_b = jax.random.split(key, 4)
    params = init_params(k_param)
    # Perturb the proj-LayerNorm affine away from (1, 0) so the gamma/beta
    # folding is actually exercised by the test.
    params['ln_g'] = params['ln_g'] + 0.1 * jax.random.normal(k_g, (3, E), jnp.float32)
    params['ln_b'] = params['ln_b'] + 0.1 * jax.random.normal(k_b, (3, E), jnp.float32)

    x = jax.random.normal(k_x, (2, 1, 28, 28), dtype=jnp.float32)

    y = jax.block_until_ready(hopfield_module_forward(x, params))
    y_ref = jax.block_until_ready(reference_forward(x, params))

    assert y.shape == (2, 1, 28, 28) and y.dtype == jnp.float32
    assert jnp.allclose(y, y_ref, atol=2e-3, rtol=2e-3), "mismatch vs reference"
    print("KERNEL_OK")
</pallas_src>

<mosaic_0001>
module attributes {stable_mosaic.version = 11 : i64} {
  func.func @hopfield_kernel(%arg0: i32, %arg1: memref<8x784xf32, #tpu.memory_space<vmem>>, %arg2: memref<784x64xbf16, #tpu.memory_space<vmem>>, %arg3: memref<64x784xbf16, #tpu.memory_space<vmem>>, %arg4: memref<1x784xf32, #tpu.memory_space<vmem>>, %arg5: memref<8x784xf32, #tpu.memory_space<vmem>>) attributes {dimension_semantics = [#tpu.dimension_semantics<parallel>], iteration_bounds = array<i64: 1>, scalar_prefetch = 0 : i64, scratch_operands = 0 : i64, tpu.core_type = #tpu.core_type<tc>, window_params = [{transform_indices = @transform_0, window_bounds = array<i64: 8, 784>}, {pipeline_mode = #tpu.pipeline_mode<synchronous>, transform_indices = @transform_1, window_bounds = array<i64: 784, 64>}, {pipeline_mode = #tpu.pipeline_mode<synchronous>, transform_indices = @transform_2, window_bounds = array<i64: 64, 784>}, {pipeline_mode = #tpu.pipeline_mode<synchronous>, transform_indices = @transform_3, window_bounds = array<i64: 1, 784>}, {transform_indices = @transform_4, window_bounds = array<i64: 8, 784>}]} {
    %c0 = arith.constant 0 : index
    %c0_0 = arith.constant 0 : index
    %0 = vector.load %arg1[%c0, %c0_0] : memref<8x784xf32, #tpu.memory_space<vmem>>, vector<8x784xf32>
    %cst = arith.constant dense<0.000000e+00> : vector<8xf32>
    %1 = vector.multi_reduction <add>, %0, %cst [1] : vector<8x784xf32> to vector<8xf32>
    %2 = vector.shape_cast %1 : vector<8xf32> to vector<8x1xf32>
    %cst_1 = arith.constant 7.840000e+02 : f32
    %3 = vector.broadcast %cst_1 : f32 to vector<8x1xf32>
    %4 = arith.divf %2, %3 : vector<8x1xf32>
    %5 = vector.broadcast %4 : vector<8x1xf32> to vector<8x784xf32>
    %6 = arith.subf %0, %5 : vector<8x784xf32>
    %7 = arith.mulf %6, %6 : vector<8x784xf32>
    %cst_2 = arith.constant dense<0.000000e+00> : vector<8xf32>
    %8 = vector.multi_reduction <add>, %7, %cst_2 [1] : vector<8x784xf32> to vector<8xf32>
    %9 = vector.shape_cast %8 : vector<8xf32> to vector<8x1xf32>
    %cst_3 = arith.constant 7.840000e+02 : f32
    %10 = vector.broadcast %cst_3 : f32 to vector<8x1xf32>
    %11 = arith.divf %9, %10 : vector<8x1xf32>
    %cst_4 = arith.constant 9.99999974E-6 : f32
    %12 = vector.broadcast %cst_4 : f32 to vector<8x1xf32>
    %13 = arith.addf %11, %12 : vector<8x1xf32>
    %14 = math.rsqrt %13 : vector<8x1xf32>
    %15 = vector.broadcast %14 : vector<8x1xf32> to vector<8x784xf32>
    %16 = arith.mulf %6, %15 : vector<8x784xf32>
    %17 = arith.truncf %16 : vector<8x784xf32> to vector<8x784xbf16>
    %c0_5 = arith.constant 0 : index
    %c0_6 = arith.constant 0 : index
    %18 = vector.load %arg2[%c0_5, %c0_6] : memref<784x64xbf16, #tpu.memory_space<vmem>>, vector<784x64xbf16>
    %cst_7 = arith.constant dense<0.000000e+00> : vector<8x64xf32>
    %19 = tpu.matmul %17, %18, %cst_7 {dimension_numbers = #tpu.dot_dimension_numbers<[1], [0], [0], [1], [0, 0, 1, 1], [], []>} : vector<8x784xbf16>, vector<784x64xbf16>, vector<8x64xf32> -> vector<8x64xf32>
    %20 = arith.truncf %19 : vector<8x64xf32> to vector<8x64xbf16>
    %c0_8 = arith.constant 0 : index
    %c0_9 = arith.constant 0 : index
    %21 = vector.load %arg3[%c0_8, %c0_9] : memref<64x784xbf16, #tpu.memory_space<vmem>>, vector<64x784xbf16>
    %cst_10 = arith.constant dense<0.000000e+00> : vector<8x784xf32>
    %22 = tpu.matmul %20, %21, %cst_10 {dimension_numbers = #tpu.dot_dimension_numbers<[1], [0], [0], [1], [0, 0, 1, 1], [], []>} : vector<8x64xbf16>, vector<64x784xbf16>, vector<8x784xf32> -> vector<8x784xf32>
    %c0_11 = arith.constant 0 : index
    %c0_12 = arith.constant 0 : index
    %23 = vector.load %arg4[%c0_11, %c0_12] : memref<1x784xf32, #tpu.memory_space<vmem>>, vector<1x784xf32>
    %24 = vector.broadcast %23 : vector<1x784xf32> to vector<8x784xf32>
    %25 = arith.addf %22, %24 : vector<8x784xf32>
    %cst_13 = arith.constant 5.000000e-01 : f32
    %26 = vector.broadcast %cst_13 : f32 to vector<8x784xf32>
    %27 = arith.mulf %26, %25 : vector<8x784xf32>
    %28 = math.tanh %27 : vector<8x784xf32>
    %cst_14 = arith.constant 5.000000e-01 : f32
    %29 = vector.broadcast %cst_14 : f32 to vector<8x784xf32>
    %30 = arith.mulf %29, %28 : vector<8x784xf32>
    %cst_15 = arith.constant 5.000000e-01 : f32
    %31 = vector.broadcast %cst_15 : f32 to vector<8x784xf32>
    %32 = arith.addf %30, %31 : vector<8x784xf32>
    %c0_16 = arith.constant 0 : index
    %c0_17 = arith.constant 0 : index
    %33 = vector.load %arg5[%c0_16, %c0_17] : memref<8x784xf32, #tpu.memory_space<vmem>>, vector<8x784xf32>
    tpu.vector_store %arg5[%c0_16, %c0_17], %32 {strides = array<i32>} : memref<8x784xf32, #tpu.memory_space<vmem>>, vector<8x784xf32>,
    return
  }
  func.func @transform_0(%arg0: i32) -> (i32, i32) {
    %c0_i32 = arith.constant 0 : i32
    %c0_i32_0 = arith.constant 0 : i32
    return %arg0, %c0_i32 : i32, i32
  }
  func.func @transform_1(%arg0: i32) -> (i32, i32) {
    %c0_i32 = arith.constant 0 : i32
    %c0_i32_0 = arith.constant 0 : i32
    %c0_i32_1 = arith.constant 0 : i32
    return %c0_i32, %c0_i32_0 : i32, i32
  }
  func.func @transform_2(%arg0: i32) -> (i32, i32) {
    %c0_i32 = arith.constant 0 : i32
    %c0_i32_0 = arith.constant 0 : i32
    %c0_i32_1 = arith.constant 0 : i32
    return %c0_i32, %c0_i32_0 : i32, i32
  }
  func.func @transform_3(%arg0: i32) -> (i32, i32) {
    %c0_i32 = arith.constant 0 : i32
    %c0_i32_0 = arith.constant 0 : i32
    %c0_i32_1 = arith.constant 0 : i32
    return %c0_i32, %c0_i32_0 : i32, i32
  }
  func.func @transform_4(%arg0: i32) -> (i32, i32) {
    %c0_i32 = arith.constant 0 : i32
    %c0_i32_0 = arith.constant 0 : i32
    return %arg0, %c0_i32 : i32, i32
  }
}

</mosaic_0001>

<llo_original>
// kernel: tpu_custom_call.1
$region0: #{tpu_custom_call.1}
  #allocation0 [shape = 'u32[]', space=smem, size = 0x4, offset = 0x4, fixed_abs, tag = 'smem constant byte address 0x4 - core index']
  #allocation1 [shape = 'u32[72,128]{1,0:T(1,128)}', space=vmem, size = 0x9000, scoped, tag = 'internal scratch']
  %s0 = inlined_call_operand.vmem [shape: f32[2,784], index: 0, kind: input, shape index: {}]
  %s1 = inlined_call_operand.vmem [shape: bf16[784,64], index: 1, kind: input, shape index: {}]
  %s2 = inlined_call_operand.vmem [shape: bf16[64,784], index: 2, kind: input, shape index: {}]
  %s3 = inlined_call_operand.vmem [shape: f32[1,784], index: 3, kind: input, shape index: {}]
  %s4 = inlined_call_operand.hbm [shape: f32[2,784], index: 4, kind: output, shape index: {}]
  %s5 = sld [smem:[#allocation0]]
  $region26: #{tpu_custom_call.1} parent=0
    _
  %s7 = ssub.s32 1, %s5
  %s8 = scalar_select 0, %s7, %s5
  $region1: #{tpu_custom_call.1} parent=0
    #allocation2 [shape = 'u8[28672]{0}', space=vmem, size = 0x7000, scoped, tag = 'output window, operand 0, single buffered']
    #allocation3 [shape = 's32[1]{0}', space=sflag, size = 0x4, scoped, tag = 'scoped memory for tpu_custom_call.1']
    %9 = vsyncpa [#allocation3], 0
    // Predicated region
    $region2: #{tpu_custom_call.1} parent=1 // pred_check
      _
    $region3: #{tpu_custom_call.1} parent=1 // pred_check_branch
      %11 = sbr.rel (0) target = $region5
    $region4: #{tpu_custom_call.1} parent=1 // pred_region
      _
    $region5: #{tpu_custom_call.1} parent=1 // pred_fallthru
      _
    // Predicated region
    $region6: #{tpu_custom_call.1} parent=1 // pred_check
      _
    $region7: #{tpu_custom_call.1} parent=1 // pred_check_branch
      %13 = sbr.rel (0) target = $region9
    $region8: #{tpu_custom_call.1} parent=1 // pred_region
      _
    $region9: #{tpu_custom_call.1} parent=1 // pred_fallthru
      _
    // Predicated region
    $region10: #{tpu_custom_call.1} parent=1 // pred_check
      _
    $region11: #{tpu_custom_call.1} parent=1 // pred_check_branch
      %15 = sbr.rel (0) target = $region13
    $region12: #{tpu_custom_call.1} parent=1 // pred_region
      _
    $region13: #{tpu_custom_call.1} parent=1 // pred_fallthru
      _
    // Predicated region
    $region14: #{tpu_custom_call.1} parent=1 // pred_check
      _
    $region15: #{tpu_custom_call.1} parent=1 // pred_check_branch
      %17 = sbr.rel (0) target = $region17
    $region16: #{tpu_custom_call.1} parent=1 // pred_region
      _
    $region17: #{tpu_custom_call.1} parent=1 // pred_fallthru
      _
    %v19 = vld [vmem:[%s0] sm:$0xff]
    %v20 = vld [vmem:[%s0 + $0x8] sm:$0x3f]
    %v21 = vld [vmem:[%s0 + $0xe] sm:$0xff]
    %v22 = vld [vmem:[%s0 + $0x16] sm:$0x3f]
    %v23 = vld [vmem:[%s0 + $0x1c] sm:$0xff]
    %v24 = vld [vmem:[%s0 + $0x24] sm:$0x3f]
    %v25 = vld [vmem:[%s0 + $0x2a] sm:$0xff]
    %v26 = vld [vmem:[%s0 + $0x32] sm:$0x3f]
    %35 = vst [vmem:[#allocation1] ss:$4 sm:$0xff] %v19
    %s36 = scalar_lea.vmem [#allocation1], 1
    %37 = vst [vmem:[%s36] ss:$4 sm:$0xff] %v21
    %s38 = scalar_lea.vmem [#allocation1], 2
    %39 = vst [vmem:[%s38] ss:$4 sm:$0xff] %v23
    %s40 = scalar_lea.vmem [#allocation1], 3
    %41 = vst [vmem:[%s40] ss:$4 sm:$0xff] %v25
    %s42 = scalar_lea.vmem [#allocation1], 32
    %43 = vst [vmem:[%s42] ss:$4 sm:$0xff] %v20
    %s44 = scalar_lea.vmem [#allocation1], 33
    %45 = vst [vmem:[%s44] ss:$4 sm:$0xff] %v22
    %s46 = scalar_lea.vmem [#allocation1], 34
    %47 = vst [vmem:[%s46] ss:$4 sm:$0xff] %v24
    %s48 = scalar_lea.vmem [#allocation1], 35
    %49 = vst [vmem:[%s48] ss:$4 sm:$0xff] %v26
    %v50 = vld.sshfl [vmem:[#allocation1] sm:$0xff pattern:$0x73625140]
    %v51 = vld.sshfl [vmem:[#allocation1 + $0x8] sm:$0xff pattern:$0x73625140]
    %v52 = vld.sshfl [vmem:[#allocation1 + $0x10] sm:$0xff pattern:$0x73625140]
    %v53 = vld.sshfl [vmem:[#allocation1 + $0x18] sm:$0xff pattern:$0x73625140]
    %v54 = vld.sshfl [vmem:[#allocation1 + $0x20] sm:$0xff pattern:$0x73625140]
    %v55 = vld.sshfl [vmem:[#allocation1 + $0x28] sm:$0xff pattern:$0x73625140]
    %v56 = vld.sshfl [vmem:[#allocation1 + $0x30] sm:$0xff pattern:$0x73625140]
    %v64 = vadd.f32 %v50, %v51
    %v65 = vadd.f32 %v64, %v52
    %v66 = vadd.f32 %v65, %v53
    %v67 = vadd.f32 %v66, %v54
    %v68 = vadd.f32 %v67, %v55
    %vm69 = vcmask 130048
    %v70 = vsel %vm69, %v56, 0.0
    %v71 = vadd.f32 %v68, %v70
    %72 = vadd.xlane.f32.xlu0 %v71
    %v73 = vpop.xlane.xlu0 %72
    %v74 = vrcp.pop 784.0
    %v75 = vmul.f32 784.0, %v74
    %v76 = vsub.f32 1.0, %v75
    %v77 = vmul.f32 %v74, %v76
    %v78 = vadd.f32 %v74, %v77
    %vm79 = vweird.f32 %v74
    %v80 = vsel %vm79, %v74, %v78
    %v81 = vmul.f32 %v73, %v80
    %v84 = vunpack.c.l.s4 269488144
    %v85 = vunpack.c.0.s8 %v84
    %v86 = vperm.slane %v81, %v85
    %v88 = vunpack.c.l.s4 842150450
    %v89 = vunpack.c.0.s8 %v88
    %v90 = vperm.slane %v81, %v89
    %v92 = vunpack.c.l.s4 1414812756
    %v93 = vunpack.c.0.s8 %v92
    %v94 = vperm.slane %v81, %v93
    %v96 = vunpack.c.l.s4 1987475062
    %v97 = vunpack.c.0.s8 %v96
    %v98 = vperm.slane %v81, %v97
    %v103 = vsub.f32 %v19, %v86
    %v104 = vsub.f32 %v20, %v86
    %v105 = vsub.f32 %v21, %v90
    %v106 = vsub.f32 %v22, %v90
    %v107 = vsub.f32 %v23, %v94
    %v108 = vsub.f32 %v24, %v94
    %v109 = vsub.f32 %v25, %v98
    %v110 = vsub.f32 %v26, %v98
    %v111 = vmul.f32 %v103, %v103
    %v112 = vmul.f32 %v104, %v104
    %v113 = vmul.f32 %v105, %v105
    %v114 = vmul.f32 %v106, %v106
    %v115 = vmul.f32 %v107, %v107
    %v116 = vmul.f32 %v108, %v108
    %v117 = vmul.f32 %v109, %v109
    %v118 = vmul.f32 %v110, %v110
    %127 = vst [vmem:[#allocation1] ss:$4 sm:$0xff] %v111
    %s128 = scalar_lea.vmem [#allocation1], 1
    %129 = vst [vmem:[%s128] ss:$4 sm:$0xff] %v113
    %s130 = scalar_lea.vmem [#allocation1], 2
    %131 = vst [vmem:[%s130] ss:$4 sm:$0xff] %v115
    %s132 = scalar_lea.vmem [#allocation1], 3
    %133 = vst [vmem:[%s132] ss:$4 sm:$0xff] %v117
    %s134 = scalar_lea.vmem [#allocation1], 32
    %135 = vst [vmem:[%s134] ss:$4 sm:$0xff] %v112
    %s136 = scalar_lea.vmem [#allocation1], 33
    %137 = vst [vmem:[%s136] ss:$4 sm:$0xff] %v114
    %s138 = scalar_lea.vmem [#allocation1], 34
    %139 = vst [vmem:[%s138] ss:$4 sm:$0xff] %v116
    %s140 = scalar_lea.vmem [#allocation1], 35
    %141 = vst [vmem:[%s140] ss:$4 sm:$0xff] %v118
    %v142 = vld.sshfl [vmem:[#allocation1] sm:$0xff pattern:$0x73625140]
    %v143 = vld.sshfl [vmem:[#allocation1 + $0x8] sm:$0xff pattern:$0x73625140]
    %v144 = vld.sshfl [vmem:[#allocation1 + $0x10] sm:$0xff pattern:$0x73625140]
    %v145 = vld.sshfl [vmem:[#allocation1 + $0x18] sm:$0xff pattern:$0x73625140]
    %v146 = vld.sshfl [vmem:[#allocation1 + $0x20] sm:$0xff pattern:$0x73625140]
    %v147 = vld.sshfl [vmem:[#allocation1 + $0x28] sm:$0xff pattern:$0x73625140]
    %v148 = vld.sshfl [vmem:[#allocation1 + $0x30] sm:$0xff pattern:$0x73625140]
    %v156 = vadd.f32 %v142, %v143
    %v157 = vadd.f32 %v156, %v144
    %v158 = vadd.f32 %v157, %v145
    %v159 = vadd.f32 %v158, %v146
    %v160 = vadd.f32 %v159, %v147
    %v161 = vsel %vm69, %v148, 0.0
    %v162 = vadd.f32 %v160, %v161
    %163 = vadd.xlane.f32.xlu0 %v162
    %v164 = vpop.xlane.xlu0 %163
    %v165 = vmul.f32 %v164, %v80
    %v166 = vadd.f32 %v165, 1e-05
    %v167 = vrsqrt.pop %v166
    %v168 = vmul.f32 %v167, %v166
    %v169 = vmul.f32 %v168, %v167
    %v170 = vmul.f32 0.5, %v169
    %v171 = vsub.f32 1.5, %v170
    %v172 = vmul.f32 %v167, %v171
    %vm173 = vweird.f32 %v166
    %vm174 = vweird.f32 %v167
    %vm175 = vmor %vm173, %vm174
    %v176 = vsel %vm175, %v167, %v172
    %v179 = vunpack.c.l.s4 269488144
    %v180 = vunpack.c.0.s8 %v179
    %v181 = vperm.slane %v176, %v180
    %v183 = vunpack.c.l.s4 842150450
    %v184 = vunpack.c.0.s8 %v183
    %v185 = vperm.slane %v176, %v184
    %v187 = vunpack.c.l.s4 1414812756
    %v188 = vunpack.c.0.s8 %v187
    %v189 = vperm.slane %v176, %v188
    %v191 = vunpack.c.l.s4 1987475062
    %v192 = vunpack.c.0.s8 %v191
    %v193 = vperm.slane %v176, %v192
    %v198 = vmul.f32 %v103, %v181
    %v199 = vmul.f32 %v104, %v181
    %v200 = vmul.f32 %v105, %v185
    %v201 = vmul.f32 %v106, %v185
    %v202 = vmul.f32 %v107, %v189
    %v203 = vmul.f32 %v108, %v189
    %v204 = vmul.f32 %v109, %v193
    %v205 = vmul.f32 %v110, %v193
    %214 = vst [vmem:[#allocation1] ss:$4 sm:$0xff] %v198
    %s215 = scalar_lea.vmem [#allocation1], 1
    %216 = vst [vmem:[%s215] ss:$4 sm:$0xff] %v200
    %s217 = scalar_lea.vmem [#allocation1], 2
    %218 = vst [vmem:[%s217] ss:$4 sm:$0xff] %v202
    %s219 = scalar_lea.vmem [#allocation1], 3
    %220 = vst [vmem:[%s219] ss:$4 sm:$0xff] %v204
    %s221 = scalar_lea.vmem [#allocation1], 32
    %222 = vst [vmem:[%s221] ss:$4 sm:$0xff] %v199
    %s223 = scalar_lea.vmem [#allocation1], 33
    %224 = vst [vmem:[%s223] ss:$4 sm:$0xff] %v201
    %s225 = scalar_lea.vmem [#allocation1], 34
    %226 = vst [vmem:[%s225] ss:$4 sm:$0xff] %v203
    %s227 = scalar_lea.vmem [#allocation1], 35
    %228 = vst [vmem:[%s227] ss:$4 sm:$0xff] %v205
    %v229 = vld.sshfl [vmem:[#allocation1] sm:$0xff pattern:$0x73625140]
    %v230 = vld.sshfl [vmem:[#allocation1 + $0x8] sm:$0xff pattern:$0x73625140]
    %v231 = vld.sshfl [vmem:[#allocation1 + $0x10] sm:$0xff pattern:$0x73625140]
    %v232 = vld.sshfl [vmem:[#allocation1 + $0x18] sm:$0xff pattern:$0x73625140]
    %v233 = vld.sshfl [vmem:[#allocation1 + $0x20] sm:$0xff pattern:$0x73625140]
    %v234 = vld.sshfl [vmem:[#allocation1 + $0x28] sm:$0xff pattern:$0x73625140]
    %v235 = vld.sshfl [vmem:[#allocation1 + $0x30] sm:$0xff pattern:$0x73625140]
    %v243 = vpack.c.bf16 %v229, %v229
    %v244 = vpack.c.bf16 %v230, %v230
    %v245 = vpack.c.bf16 %v231, %v231
    %v246 = vpack.c.bf16 %v232, %v232
    %v247 = vpack.c.bf16 %v233, %v233
    %v248 = vpack.c.bf16 %v234, %v234
    %v249 = vpack.c.bf16 %v235, %v235
    %v250 = vld [vmem:[%s1] sm:$0xf]
    %v251 = vld [vmem:[%s1 + $0x4] sm:$0xf]
    %v252 = vld [vmem:[%s1 + $0x8] sm:$0xf]
    %v253 = vld [vmem:[%s1 + $0xc] sm:$0xf]
    %v254 = vld [vmem:[%s1 + $0x10] sm:$0xf]
    %v255 = vld [vmem:[%s1 + $0x14] sm:$0xf]
    %v256 = vld [vmem:[%s1 + $0x18] sm:$0xf]
    %v257 = vld [vmem:[%s1 + $0x1c] sm:$0xf]
    %v258 = vld [vmem:[%s1 + $0x20] sm:$0xf]
    %v259 = vld [vmem:[%s1 + $0x24] sm:$0xf]
    %v260 = vld [vmem:[%s1 + $0x28] sm:$0xf]
    %v261 = vld [vmem:[%s1 + $0x2c] sm:$0xf]
    %v262 = vld [vmem:[%s1 + $0x30] sm:$0xf]
    %v263 = vld [vmem:[%s1 + $0x34] sm:$0xf]
    %v264 = vld [vmem:[%s1 + $0x38] sm:$0xf]
    %v265 = vld [vmem:[%s1 + $0x3c] sm:$0xf]
    %v266 = vld [vmem:[%s1 + $0x40] sm:$0xf]
    %v267 = vld [vmem:[%s1 + $0x44] sm:$0xf]
    %v268 = vld [vmem:[%s1 + $0x48] sm:$0xf]
    %v269 = vld [vmem:[%s1 + $0x4c] sm:$0xf]
    %v270 = vld [vmem:[%s1 + $0x50] sm:$0xf]
    %v271 = vld [vmem:[%s1 + $0x54] sm:$0xf]
    %v272 = vld [vmem:[%s1 + $0x58] sm:$0xf]
    %v273 = vld [vmem:[%s1 + $0x5c] sm:$0xf]
    %v274 = vld [vmem:[%s1 + $0x60] sm:$0xf]
    %v275 = vld [vmem:[%s1 + $0x64] sm:$0xf]
    %v276 = vld [vmem:[%s1 + $0x68] sm:$0xf]
    %v277 = vld [vmem:[%s1 + $0x6c] sm:$0xf]
    %v278 = vld [vmem:[%s1 + $0x70] sm:$0xf]
    %v279 = vld [vmem:[%s1 + $0x74] sm:$0xf]
    %v280 = vld [vmem:[%s1 + $0x78] sm:$0xf]
    %v281 = vld [vmem:[%s1 + $0x7c] sm:$0xf]
    %v282 = vld [vmem:[%s1 + $0x80] sm:$0xf]
    %v283 = vld [vmem:[%s1 + $0x84] sm:$0xf]
    %v284 = vld [vmem:[%s1 + $0x88] sm:$0xf]
    %v285 = vld [vmem:[%s1 + $0x8c] sm:$0xf]
    %v286 = vld [vmem:[%s1 + $0x90] sm:$0xf]
    %v287 = vld [vmem:[%s1 + $0x94] sm:$0xf]
    %v288 = vld [vmem:[%s1 + $0x98] sm:$0xf]
    %v289 = vld [vmem:[%s1 + $0x9c] sm:$0xf]
    %v290 = vld [vmem:[%s1 + $0xa0] sm:$0xf]
    %v291 = vld [vmem:[%s1 + $0xa4] sm:$0xf]
    %v292 = vld [vmem:[%s1 + $0xa8] sm:$0xf]
    %v293 = vld [vmem:[%s1 + $0xac] sm:$0xf]
    %v294 = vld [vmem:[%s1 + $0xb0] sm:$0xf]
    %v295 = vld [vmem:[%s1 + $0xb4] sm:$0xf]
    %v296 = vld [vmem:[%s1 + $0xb8] sm:$0xf]
    %v297 = vld [vmem:[%s1 + $0xbc] sm:$0xf]
    %v298 = vld [vmem:[%s1 + $0xc0] sm:$0xf]
    %v299 = vld [vmem:[%s1 + $0xc4] sm:$0xf]
    %v300 = vld [vmem:[%s1 + $0xc8] sm:$0xf]
    %v301 = vld [vmem:[%s1 + $0xcc] sm:$0xf]
    %v302 = vld [vmem:[%s1 + $0xd0] sm:$0xf]
    %v303 = vld [vmem:[%s1 + $0xd4] sm:$0xf]
    %v304 = vld [vmem:[%s1 + $0xd8] sm:$0xf]
    %v305 = vld [vmem:[%s1 + $0xdc] sm:$0xf]
    %v306 = vld [vmem:[%s1 + $0xe0] sm:$0xf]
    %v307 = vld [vmem:[%s1 + $0xe4] sm:$0xf]
    %v308 = vld [vmem:[%s1 + $0xe8] sm:$0xf]
    %v309 = vld [vmem:[%s1 + $0xec] sm:$0xf]
    %v310 = vld [vmem:[%s1 + $0xf0] sm:$0xf]
    %v311 = vld [vmem:[%s1 + $0xf4] sm:$0xf]
    %v312 = vld [vmem:[%s1 + $0xf8] sm:$0xf]
    %v313 = vld [vmem:[%s1 + $0xfc] sm:$0xf]
    %v314 = vld [vmem:[%s1 + $0x100] sm:$0xf]
    %v315 = vld [vmem:[%s1 + $0x104] sm:$0xf]
    %v316 = vld [vmem:[%s1 + $0x108] sm:$0xf]
    %v317 = vld [vmem:[%s1 + $0x10c] sm:$0xf]
    %v318 = vld [vmem:[%s1 + $0x110] sm:$0xf]
    %v319 = vld [vmem:[%s1 + $0x114] sm:$0xf]
    %v320 = vld [vmem:[%s1 + $0x118] sm:$0xf]
    %v321 = vld [vmem:[%s1 + $0x11c] sm:$0xf]
    %v322 = vld [vmem:[%s1 + $0x120] sm:$0xf]
    %v323 = vld [vmem:[%s1 + $0x124] sm:$0xf]
    %v324 = vld [vmem:[%s1 + $0x128] sm:$0xf]
    %v325 = vld [vmem:[%s1 + $0x12c] sm:$0xf]
    %v326 = vld [vmem:[%s1 + $0x130] sm:$0xf]
    %v327 = vld [vmem:[%s1 + $0x134] sm:$0xf]
    %v328 = vld [vmem:[%s1 + $0x138] sm:$0xf]
    %v329 = vld [vmem:[%s1 + $0x13c] sm:$0xf]
    %v330 = vld [vmem:[%s1 + $0x140] sm:$0xf]
    %v331 = vld [vmem:[%s1 + $0x144] sm:$0xf]
    %v332 = vld [vmem:[%s1 + $0x148] sm:$0xf]
    %v333 = vld [vmem:[%s1 + $0x14c] sm:$0xf]
    %v334 = vld [vmem:[%s1 + $0x150] sm:$0xf]
    %v335 = vld [vmem:[%s1 + $0x154] sm:$0xf]
    %v336 = vld [vmem:[%s1 + $0x158] sm:$0xf]
    %v337 = vld [vmem:[%s1 + $0x15c] sm:$0xf]
    %v338 = vld [vmem:[%s1 + $0x160] sm:$0xf]
    %v339 = vld [vmem:[%s1 + $0x164] sm:$0xf]
    %v340 = vld [vmem:[%s1 + $0x168] sm:$0xf]
    %v341 = vld [vmem:[%s1 + $0x16c] sm:$0xf]
    %v342 = vld [vmem:[%s1 + $0x170] sm:$0xf]
    %v343 = vld [vmem:[%s1 + $0x174] sm:$0xf]
    %v344 = vld [vmem:[%s1 + $0x178] sm:$0xf]
    %v345 = vld [vmem:[%s1 + $0x17c] sm:$0xf]
    %v346 = vld [vmem:[%s1 + $0x180] sm:$0xf]
    %v347 = vld [vmem:[%s1 + $0x184] sm:$0xf]
    %v446 = vunpack.c.l.b16 %v250
    %v447 = vunpack.c.l.b16 %v251
    %v448 = vunpack.c.l.b16 %v252
    %v449 = vunpack.c.l.b16 %v253
    %v450 = vunpack.c.l.b16 %v254
    %v451 = vunpack.c.l.b16 %v255
    %v452 = vunpack.c.l.b16 %v256
    %v453 = vunpack.c.l.b16 %v257
    %v454 = vunpack.c.l.b16 %v258
    %v455 = vunpack.c.l.b16 %v259
    %v456 = vunpack.c.l.b16 %v260
    %v457 = vunpack.c.l.b16 %v261
    %v458 = vunpack.c.l.b16 %v262
    %v459 = vunpack.c.l.b16 %v263
    %v460 = vunpack.c.l.b16 %v264
    %v461 = vunpack.c.l.b16 %v265
    %v462 = vunpack.c.l.b16 %v266
    %v463 = vunpack.c.l.b16 %v267
    %v464 = vunpack.c.l.b16 %v268
    %v465 = vunpack.c.l.b16 %v269
    %v466 = vunpack.c.l.b16 %v270
    %v467 = vunpack.c.l.b16 %v271
    %v468 = vunpack.c.l.b16 %v272
    %v469 = vunpack.c.l.b16 %v273
    %v470 = vunpack.c.l.b16 %v274
    %v471 = vunpack.c.l.b16 %v275
    %v472 = vunpack.c.l.b16 %v276
    %v473 = vunpack.c.l.b16 %v277
    %v474 = vunpack.c.l.b16 %v278
    %v475 = vunpack.c.l.b16 %v279
    %v476 = vunpack.c.l.b16 %v280
    %v477 = vunpack.c.l.b16 %v281
    %v478 = vunpack.c.l.b16 %v282
    %v479 = vunpack.c.l.b16 %v283
    %v480 = vunpack.c.l.b16 %v284
    %v481 = vunpack.c.l.b16 %v285
    %v482 = vunpack.c.l.b16 %v286
    %v483 = vunpack.c.l.b16 %v287
    %v484 = vunpack.c.l.b16 %v288
    %v485 = vunpack.c.l.b16 %v289
    %v486 = vunpack.c.l.b16 %v290
    %v487 = vunpack.c.l.b16 %v291
    %v488 = vunpack.c.l.b16 %v292
    %v489 = vunpack.c.l.b16 %v293
    %v490 = vunpack.c.l.b16 %v294
    %v491 = vunpack.c.l.b16 %v295
    %v492 = vunpack.c.l.b16 %v296
    %v493 = vunpack.c.l.b16 %v297
    %v494 = vunpack.c.l.b16 %v298
    %v495 = vunpack.c.l.b16 %v299
    %v496 = vunpack.c.l.b16 %v300
    %v497 = vunpack.c.l.b16 %v301
    %v498 = vunpack.c.l.b16 %v302
    %v499 = vunpack.c.l.b16 %v303
    %v500 = vunpack.c.l.b16 %v304
    %v501 = vunpack.c.l.b16 %v305
    %v502 = vunpack.c.l.b16 %v306
    %v503 = vunpack.c.l.b16 %v307
    %v504 = vunpack.c.l.b16 %v308
    %v505 = vunpack.c.l.b16 %v309
    %v506 = vunpack.c.l.b16 %v310
    %v507 = vunpack.c.l.b16 %v311
    %v508 = vunpack.c.l.b16 %v312
    %v509 = vunpack.c.l.b16 %v313
    %v510 = vunpack.c.l.b16 %v314
    %v511 = vunpack.c.l.b16 %v315
    %v512 = vunpack.c.l.b16 %v316
    %v513 = vunpack.c.l.b16 %v317
    %v514 = vunpack.c.l.b16 %v318
    %v515 = vunpack.c.l.b16 %v319
    %v516 = vunpack.c.l.b16 %v320
    %v517 = vunpack.c.l.b16 %v321
    %v518 = vunpack.c.l.b16 %v322
    %v519 = vunpack.c.l.b16 %v323
    %v520 = vunpack.c.l.b16 %v324
    %v521 = vunpack.c.l.b16 %v325
    %v522 = vunpack.c.l.b16 %v326
    %v523 = vunpack.c.l.b16 %v327
    %v524 = vunpack.c.l.b16 %v328
    %v525 = vunpack.c.l.b16 %v329
    %v526 = vunpack.c.l.b16 %v330
    %v527 = vunpack.c.l.b16 %v331
    %v528 = vunpack.c.l.b16 %v332
    %v529 = vunpack.c.l.b16 %v333
    %v530 = vunpack.c.l.b16 %v334
    %v531 = vunpack.c.l.b16 %v335
    %v532 = vunpack.c.l.b16 %v336
    %v533 = vunpack.c.l.b16 %v337
    %v534 = vunpack.c.l.b16 %v338
    %v535 = vunpack.c.l.b16 %v339
    %v536 = vunpack.c.l.b16 %v340
    %v537 = vunpack.c.l.b16 %v341
    %v538 = vunpack.c.l.b16 %v342
    %v539 = vunpack.c.l.b16 %v343
    %v540 = vunpack.c.l.b16 %v344
    %v541 = vunpack.c.l.b16 %v345
    %v542 = vunpack.c.l.b16 %v346
    %v543 = vunpack.c.l.b16 %v347
    %v544 = vpack.c.b16 %v447, %v446
    %v545 = vpack.c.b16 %v449, %v448
    %v546 = vpack.c.b16 %v451, %v450
    %v547 = vpack.c.b16 %v453, %v452
    %v548 = vpack.c.b16 %v455, %v454
    %v549 = vpack.c.b16 %v457, %v456
    %v550 = vpack.c.b16 %v459, %v458
    %v551 = vpack.c.b16 %v461, %v460
    %v552 = vpack.c.b16 %v463, %v462
    %v553 = vpack.c.b16 %v465, %v464
    %v554 = vpack.c.b16 %v467, %v466
    %v555 = vpack.c.b16 %v469, %v468
    %v556 = vpack.c.b16 %v471, %v470
    %v557 = vpack.c.b16 %v473, %v472
    %v558 = vpack.c.b16 %v475, %v474
    %v559 = vpack.c.b16 %v477, %v476
    %v560 = vpack.c.b16 %v479, %v478
    %v561 = vpack.c.b16 %v481, %v480
    %v562 = vpack.c.b16 %v483, %v482
    %v563 = vpack.c.b16 %v485, %v484
    %v564 = vpack.c.b16 %v487, %v486
    %v565 = vpack.c.b16 %v489, %v488
    %v566 = vpack.c.b16 %v491, %v490
    %v567 = vpack.c.b16 %v493, %v492
    %v568 = vpack.c.b16 %v495, %v494
    %v569 = vpack.c.b16 %v497, %v496
    %v570 = vpack.c.b16 %v499, %v498
    %v571 = vpack.c.b16 %v501, %v500
    %v572 = vpack.c.b16 %v503, %v502
    %v573 = vpack.c.b16 %v505, %v504
    %v574 = vpack.c.b16 %v507, %v506
    %v575 = vpack.c.b16 %v509, %v508
    %v576 = vpack.c.b16 %v511, %v510
    %v577 = vpack.c.b16 %v513, %v512
    %v578 = vpack.c.b16 %v515, %v514
    %v579 = vpack.c.b16 %v517, %v516
    %v580 = vpack.c.b16 %v519, %v518
    %v581 = vpack.c.b16 %v521, %v520
    %v582 = vpack.c.b16 %v523, %v522
    %v583 = vpack.c.b16 %v525, %v524
    %v584 = vpack.c.b16 %v527, %v526
    %v585 = vpack.c.b16 %v529, %v528
    %v586 = vpack.c.b16 %v531, %v530
    %v587 = vpack.c.b16 %v533, %v532
    %v588 = vpack.c.b16 %v535, %v534
    %v589 = vpack.c.b16 %v537, %v536
    %v590 = vpack.c.b16 %v539, %v538
    %v591 = vpack.c.b16 %v541, %v540
    %v592 = vpack.c.b16 %v543, %v542
    %v643 = vsel %vm69, %v249, 0
    %645 = vmatpush.bf16.msra.mxu0 %v551
    %646 = vmatpush.bf16.msra.mxu0 %v550
    %647 = vmatpush.bf16.msra.mxu0 %v549
    %648 = vmatpush.bf16.msra.mxu0 %v548
    %649 = vmatpush.bf16.msra.mxu0 %v547
    %650 = vmatpush.bf16.msra.mxu0 %v546
    %651 = vmatpush.bf16.msra.mxu0 %v545
    %652 = vmatpush.bf16.msra.mxu0 %v544
    %653 = vmatmul.bf16.gmra.mxu0 %v243
    %v654 = vpop.f32.mrf.mxu0
    %v655 = vadd.f32 0.0, %v654
    %v656 = vpop.f32.mrf.mxu0
    %657 = vdwg.mxu0
    %658 = vmatpush.bf16.msra.mxu0 %v559
    %659 = vmatpush.bf16.msra.mxu0 %v558
    %660 = vmatpush.bf16.msra.mxu0 %v557
    %661 = vmatpush.bf16.msra.mxu0 %v556
    %662 = vmatpush.bf16.msra.mxu0 %v555
    %663 = vmatpush.bf16.msra.mxu0 %v554
    %664 = vmatpush.bf16.msra.mxu0 %v553
    %665 = vmatpush.bf16.msra.mxu0 %v552
    %666 = vmatmul.bf16.gmra.mxu0 %v244
    %v667 = vpop.f32.mrf.mxu0
    %v668 = vadd.f32 %v655, %v667
    %v669 = vpop.f32.mrf.mxu0
    %670 = vdwg.mxu0
    %671 = vmatpush.bf16.msra.mxu0 %v567
    %672 = vmatpush.bf16.msra.mxu0 %v566
    %673 = vmatpush.bf16.msra.mxu0 %v565
    %674 = vmatpush.bf16.msra.mxu0 %v564
    %675 = vmatpush.bf16.msra.mxu0 %v563
    %676 = vmatpush.bf16.msra.mxu0 %v562
    %677 = vmatpush.bf16.msra.mxu0 %v561
    %678 = vmatpush.bf16.msra.mxu0 %v560
    %679 = vmatmul.bf16.gmra.mxu0 %v245
    %v680 = vpop.f32.mrf.mxu0
    %v681 = vadd.f32 %v668, %v680
    %v682 = vpop.f32.mrf.mxu0
    %683 = vdwg.mxu0
    %684 = vmatpush.bf16.msra.mxu0 %v575
    %685 = vmatpush.bf16.msra.mxu0 %v574
    %686 = vmatpush.bf16.msra.mxu0 %v573
    %687 = vmatpush.bf16.msra.mxu0 %v572
    %688 = vmatpush.bf16.msra.mxu0 %v571
    %689 = vmatpush.bf16.msra.mxu0 %v570
    %690 = vmatpush.bf16.msra.mxu0 %v569
    %691 = vmatpush.bf16.msra.mxu0 %v568
    %692 = vmatmul.bf16.gmra.mxu0 %v246
    %v693 = vpop.f32.mrf.mxu0
    %v694 = vadd.f32 %v681, %v693
    %v695 = vpop.f32.mrf.mxu0
    %696 = vdwg.mxu0
    %697 = vmatpush.bf16.msra.mxu0 %v583
    %698 = vmatpush.bf16.msra.mxu0 %v582
    %699 = vmatpush.bf16.msra.mxu0 %v581
    %700 = vmatpush.bf16.msra.mxu0 %v580
    %701 = vmatpush.bf16.msra.mxu0 %v579
    %702 = vmatpush.bf16.msra.mxu0 %v578
    %703 = vmatpush.bf16.msra.mxu0 %v577
    %704 = vmatpush.bf16.msra.mxu0 %v576
    %705 = vmatmul.bf16.gmra.mxu0 %v247
    %v706 = vpop.f32.mrf.mxu0
    %v707 = vadd.f32 %v694, %v706
    %v708 = vpop.f32.mrf.mxu0
    %709 = vdwg.mxu0
    %710 = vmatpush.bf16.msra.mxu0 %v591
    %711 = vmatpush.bf16.msra.mxu0 %v590
    %712 = vmatpush.bf16.msra.mxu0 %v589
    %713 = vmatpush.bf16.msra.mxu0 %v588
    %714 = vmatpush.bf16.msra.mxu0 %v587
    %715 = vmatpush.bf16.msra.mxu0 %v586
    %716 = vmatpush.bf16.msra.mxu0 %v585
    %717 = vmatpush.bf16.msra.mxu0 %v584
    %718 = vmatmul.bf16.gmra.mxu0 %v248
    %v719 = vpop.f32.mrf.mxu0
    %v720 = vadd.f32 %v707, %v719
    %v721 = vpop.f32.mrf.mxu0
    %722 = vdwg.mxu0
    %723 = vmatpush.bf16.msra.mxu0 0
    %724 = vmatpush.bf16.msra.mxu0 0
    %725 = vmatpush.bf16.msra.mxu0 0
    %726 = vmatpush.bf16.msra.mxu0 0
    %727 = vmatpush.bf16.msra.mxu0 0
    %728 = vmatpush.bf16.msra.mxu0 0
    %729 = vmatpush.bf16.msra.mxu0 0
    %730 = vmatpush.bf16.msra.mxu0 %v592
    %731 = vmatmul.bf16.gmra.mxu0 %v643
    %v732 = vpop.f32.mrf.mxu0
    %v733 = vadd.f32 %v720, %v732
    %v734 = vpop.f32.mrf.mxu0
    %735 = vdwg.mxu0
    %v736 = vpack.c.bf16 %v733, %v733
    %v737 = vld [vmem:[%s2] sm:$0xff]
    %v738 = vld [vmem:[%s2 + $0x8] sm:$0xff]
    %v739 = vld [vmem:[%s2 + $0x10] sm:$0xff]
    %v740 = vld [vmem:[%s2 + $0x18] sm:$0xf]
    %v741 = vld [vmem:[%s2 + $0x1c] sm:$0xff]
    %v742 = vld [vmem:[%s2 + $0x24] sm:$0xff]
    %v743 = vld [vmem:[%s2 + $0x2c] sm:$0xff]
    %v744 = vld [vmem:[%s2 + $0x34] sm:$0xf]
    %v745 = vld [vmem:[%s2 + $0x38] sm:$0xff]
    %v746 = vld [vmem:[%s2 + $0x40] sm:$0xff]
    %v747 = vld [vmem:[%s2 + $0x48] sm:$0xff]
    %v748 = vld [vmem:[%s2 + $0x50] sm:$0xf]
    %v749 = vld [vmem:[%s2 + $0x54] sm:$0xff]
    %v750 = vld [vmem:[%s2 + $0x5c] sm:$0xff]
    %v751 = vld [vmem:[%s2 + $0x64] sm:$0xff]
    %v752 = vld [vmem:[%s2 + $0x6c] sm:$0xf]
    %v753 = vld [vmem:[%s2 + $0x70] sm:$0xff]
    %v754 = vld [vmem:[%s2 + $0x78] sm:$0xff]
    %v755 = vld [vmem:[%s2 + $0x80] sm:$0xff]
    %v756 = vld [vmem:[%s2 + $0x88] sm:$0xf]
    %v757 = vld [vmem:[%s2 + $0x8c] sm:$0xff]
    %v758 = vld [vmem:[%s2 + $0x94] sm:$0xff]
    %v759 = vld [vmem:[%s2 + $0x9c] sm:$0xff]
    %v760 = vld [vmem:[%s2 + $0xa4] sm:$0xf]
    %v761 = vld [vmem:[%s2 + $0xa8] sm:$0xff]
    %v762 = vld [vmem:[%s2 + $0xb0] sm:$0xff]
    %v763 = vld [vmem:[%s2 + $0xb8] sm:$0xff]
    %v764 = vld [vmem:[%s2 + $0xc0] sm:$0xf]
    %v765 = vld [vmem:[%s2 + $0xc4] sm:$0xff]
    %v766 = vld [vmem:[%s2 + $0xcc] sm:$0xff]
    %v767 = vld [vmem:[%s2 + $0xd4] sm:$0xff]
    %v768 = vld [vmem:[%s2 + $0xdc] sm:$0xf]
    %v769 = vld [vmem:[%s3] sm:$0x7f]
    %v771 = vperm.slane %v769, 0
    %v772 = vperm.slane %v769, 1
    %v773 = vperm.slane %v769, 2
    %v774 = vperm.slane %v769, 3
    %v775 = vperm.slane %v769, 4
    %v776 = vperm.slane %v769, 5
    %v777 = vperm.slane %v769, 6
    %v817 = vunpack.c.l.b16 %v737
    %v818 = vunpack.c.h.b16 %v737
    %v819 = vunpack.c.l.b16 %v738
    %v820 = vunpack.c.h.b16 %v738
    %v821 = vunpack.c.l.b16 %v739
    %v822 = vunpack.c.h.b16 %v739
    %v823 = vunpack.c.l.b16 %v740
    %v824 = vunpack.c.l.b16 %v741
    %v825 = vunpack.c.h.b16 %v741
    %v826 = vunpack.c.l.b16 %v742
    %v827 = vunpack.c.h.b16 %v742
    %v828 = vunpack.c.l.b16 %v743
    %v829 = vunpack.c.h.b16 %v743
    %v830 = vunpack.c.l.b16 %v744
    %v831 = vunpack.c.l.b16 %v745
    %v832 = vunpack.c.h.b16 %v745
    %v833 = vunpack.c.l.b16 %v746
    %v834 = vunpack.c.h.b16 %v746
    %v835 = vunpack.c.l.b16 %v747
    %v836 = vunpack.c.h.b16 %v747
    %v837 = vunpack.c.l.b16 %v748
    %v838 = vunpack.c.l.b16 %v749
    %v839 = vunpack.c.h.b16 %v749
    %v840 = vunpack.c.l.b16 %v750
    %v841 = vunpack.c.h.b16 %v750
    %v842 = vunpack.c.l.b16 %v751
    %v843 = vunpack.c.h.b16 %v751
    %v844 = vunpack.c.l.b16 %v752
    %v845 = vunpack.c.l.b16 %v753
    %v846 = vunpack.c.h.b16 %v753
    %v847 = vunpack.c.l.b16 %v754
    %v848 = vunpack.c.h.b16 %v754
    %v849 = vunpack.c.l.b16 %v755
    %v850 = vunpack.c.h.b16 %v755
    %v851 = vunpack.c.l.b16 %v756
    %v852 = vunpack.c.l.b16 %v757
    %v853 = vunpack.c.h.b16 %v757
    %v854 = vunpack.c.l.b16 %v758
    %v855 = vunpack.c.h.b16 %v758
    %v856 = vunpack.c.l.b16 %v759
    %v857 = vunpack.c.h.b16 %v759
    %v858 = vunpack.c.l.b16 %v760
    %v859 = vunpack.c.l.b16 %v761
    %v860 = vunpack.c.h.b16 %v761
    %v861 = vunpack.c.l.b16 %v762
    %v862 = vunpack.c.h.b16 %v762
    %v863 = vunpack.c.l.b16 %v763
    %v864 = vunpack.c.h.b16 %v763
    %v865 = vunpack.c.l.b16 %v764
    %v866 = vunpack.c.l.b16 %v765
    %v867 = vunpack.c.h.b16 %v765
    %v868 = vunpack.c.l.b16 %v766
    %v869 = vunpack.c.h.b16 %v766
    %v870 = vunpack.c.l.b16 %v767
    %v871 = vunpack.c.h.b16 %v767
    %v872 = vunpack.c.l.b16 %v768
    %v873 = vpack.c.b16 %v824, %v817
    %v874 = vpack.c.b16 %v825, %v818
    %v875 = vpack.c.b16 %v826, %v819
    %v876 = vpack.c.b16 %v827, %v820
    %v877 = vpack.c.b16 %v828, %v821
    %v878 = vpack.c.b16 %v829, %v822
    %v879 = vpack.c.b16 %v830, %v823
    %v880 = vpack.c.b16 %v838, %v831
    %v881 = vpack.c.b16 %v839, %v832
    %v882 = vpack.c.b16 %v840, %v833
    %v883 = vpack.c.b16 %v841, %v834
    %v884 = vpack.c.b16 %v842, %v835
    %v885 = vpack.c.b16 %v843, %v836
    %v886 = vpack.c.b16 %v844, %v837
    %v887 = vpack.c.b16 %v852, %v845
    %v888 = vpack.c.b16 %v853, %v846
    %v889 = vpack.c.b16 %v854, %v847
    %v890 = vpack.c.b16 %v855, %v848
    %v891 = vpack.c.b16 %v856, %v849
    %v892 = vpack.c.b16 %v857, %v850
    %v893 = vpack.c.b16 %v858, %v851
    %v894 = vpack.c.b16 %v866, %v859
    %v895 = vpack.c.b16 %v867, %v860
    %v896 = vpack.c.b16 %v868, %v861
    %v897 = vpack.c.b16 %v869, %v862
    %v898 = vpack.c.b16 %v870, %v863
    %v899 = vpack.c.b16 %v871, %v864
    %v900 = vpack.c.b16 %v872, %v865
    %vm929 = vcmask 523264
    %v931 = vsel %vm929, %v736, 0
    %933 = vmatpush.bf16.msra.mxu0 0
    %934 = vmatpush.bf16.msra.mxu0 0
    %935 = vmatpush.bf16.msra.mxu0 0
    %936 = vmatpush.bf16.msra.mxu0 0
    %937 = vmatpush.bf16.msra.mxu0 %v894
    %938 = vmatpush.bf16.msra.mxu0 %v887
    %939 = vmatpush.bf16.msra.mxu0 %v880
    %940 = vmatpush.bf16.msra.mxu0 %v873
    %941 = vmatmul.bf16.gmra.mxu0 %v931
    %v942 = vpop.f32.mrf.mxu0
    %v943 = vadd.f32 %v771, %v942
    %v944 = vpop.f32.mrf.mxu0
    %945 = vdwg.mxu0
    %946 = vmatpush.bf16.msra.mxu0 0
    %947 = vmatpush.bf16.msra.mxu0 0
    %948 = vmatpush.bf16.msra.mxu0 0
    %949 = vmatpush.bf16.msra.mxu0 0
    %950 = vmatpush.bf16.msra.mxu0 %v895
    %951 = vmatpush.bf16.msra.mxu0 %v888
    %952 = vmatpush.bf16.msra.mxu0 %v881
    %953 = vmatpush.bf16.msra.mxu0 %v874
    %954 = vmatmul.bf16.gmra.mxu0 %v931
    %v955 = vpop.f32.mrf.mxu0
    %v956 = vadd.f32 %v772, %v955
    %v957 = vpop.f32.mrf.mxu0
    %958 = vdwg.mxu0
    %959 = vmatpush.bf16.msra.mxu0 0
    %960 = vmatpush.bf16.msra.mxu0 0
    %961 = vmatpush.bf16.msra.mxu0 0
    %962 = vmatpush.bf16.msra.mxu0 0
    %963 = vmatpush.bf16.msra.mxu0 %v896
    %964 = vmatpush.bf16.msra.mxu0 %v889
    %965 = vmatpush.bf16.msra.mxu0 %v882
    %966 = vmatpush.bf16.msra.mxu0 %v875
    %967 = vmatmul.bf16.gmra.mxu0 %v931
    %v968 = vpop.f32.mrf.mxu0
    %v969 = vadd.f32 %v773, %v968
    %v970 = vpop.f32.mrf.mxu0
    %971 = vdwg.mxu0
    %972 = vmatpush.bf16.msra.mxu0 0
    %973 = vmatpush.bf16.msra.mxu0 0
    %974 = vmatpush.bf16.msra.mxu0 0
    %975 = vmatpush.bf16.msra.mxu0 0
    %976 = vmatpush.bf16.msra.mxu0 %v897
    %977 = vmatpush.bf16.msra.mxu0 %v890
    %978 = vmatpush.bf16.msra.mxu0 %v883
    %979 = vmatpush.bf16.msra.mxu0 %v876
    %980 = vmatmul.bf16.gmra.mxu0 %v931
    %v981 = vpop.f32.mrf.mxu0
    %v982 = vadd.f32 %v774, %v981
    %v983 = vpop.f32.mrf.mxu0
    %984 = vdwg.mxu0
    %985 = vmatpush.bf16.msra.mxu0 0
    %986 = vmatpush.bf16.msra.mxu0 0
    %987 = vmatpush.bf16.msra.mxu0 0
    %988 = vmatpush.bf16.msra.mxu0 0
    %989 = vmatpush.bf16.msra.mxu0 %v898
    %990 = vmatpush.bf16.msra.mxu0 %v891
    %991 = vmatpush.bf16.msra.mxu0 %v884
    %992 = vmatpush.bf16.msra.mxu0 %v877
    %993 = vmatmul.bf16.gmra.mxu0 %v931
    %v994 = vpop.f32.mrf.mxu0
    %v995 = vadd.f32 %v775, %v994
    %v996 = vpop.f32.mrf.mxu0
    %997 = vdwg.mxu0
    %998 = vmatpush.bf16.msra.mxu0 0
    %999 = vmatpush.bf16.msra.mxu0 0
    %1000 = vmatpush.bf16.msra.mxu0 0
    %1001 = vmatpush.bf16.msra.mxu0 0
    %1002 = vmatpush.bf16.msra.mxu0 %v899
    %1003 = vmatpush.bf16.msra.mxu0 %v892
    %1004 = vmatpush.bf16.msra.mxu0 %v885
    %1005 = vmatpush.bf16.msra.mxu0 %v878
    %1006 = vmatmul.bf16.gmra.mxu0 %v931
    %v1007 = vpop.f32.mrf.mxu0
    %v1008 = vadd.f32 %v776, %v1007
    %v1009 = vpop.f32.mrf.mxu0
    %1010 = vdwg.mxu0
    %1011 = vmatpush.bf16.msra.mxu0 0
    %1012 = vmatpush.bf16.msra.mxu0 0
    %1013 = vmatpush.bf16.msra.mxu0 0
    %1014 = vmatpush.bf16.msra.mxu0 0
    %1015 = vmatpush.bf16.msra.mxu0 %v900
    %1016 = vmatpush.bf16.msra.mxu0 %v893
    %1017 = vmatpush.bf16.msra.mxu0 %v886
    %1018 = vmatpush.bf16.msra.mxu0 %v879
    %1019 = vmatmul.bf16.gmra.mxu0 %v931
    %v1020 = vpop.f32.mrf.mxu0
    %v1021 = vadd.f32 %v777, %v1020
    %v1022 = vpop.f32.mrf.mxu0
    %1023 = vdwg.mxu0
    %v1024 = vmul.f32 %v943, 0.5
    %v1025 = vmul.f32 %v956, 0.5
    %v1026 = vmul.f32 %v969, 0.5
    %v1027 = vmul.f32 %v982, 0.5
    %v1028 = vmul.f32 %v995, 0.5
    %v1029 = vmul.f32 %v1008, 0.5
    %v1030 = vmul.f32 %v1021, 0.5
    %v1031 = vtanh.pop %v1024
    %v1032 = vtanh.pop %v1025
    %v1033 = vtanh.pop %v1026
    %v1034 = vtanh.pop %v1027
    %v1035 = vtanh.pop %v1028
    %v1036 = vtanh.pop %v1029
    %v1037 = vtanh.pop %v1030
    %v1038 = vmul.f32 %v1031, 0.5
    %v1039 = vmul.f32 %v1032, 0.5
    %v1040 = vmul.f32 %v1033, 0.5
    %v1041 = vmul.f32 %v1034, 0.5
    %v1042 = vmul.f32 %v1035, 0.5
    %v1043 = vmul.f32 %v1036, 0.5
    %v1044 = vmul.f32 %v1037, 0.5
    %v1045 = vadd.f32 %v1038, 0.5
    %v1046 = vadd.f32 %v1039, 0.5
    %v1047 = vadd.f32 %v1040, 0.5
    %v1048 = vadd.f32 %v1041, 0.5
    %v1049 = vadd.f32 %v1042, 0.5
    %v1050 = vadd.f32 %v1043, 0.5
    %v1051 = vadd.f32 %v1044, 0.5
    %v1059 = vrot.slane %v1046, 6
    %v1060 = vrot.slane %v1047, 4
    %v1061 = vrot.slane %v1048, 2
    %v1062 = vrot.slane %v1050, 6
    %v1063 = vrot.slane %v1051, 4
    %vm1064 = vcmask 1041408
    %v1065 = vsel %vm1064, %v1045, %v1059
    %vm1066 = vcmask 1045508
    %v1067 = vsel %vm1066, %v1060, %v1061
    %vm1068 = vcmask 1043456
    %v1069 = vsel %vm1068, %v1065, %v1067
    %v1070 = vsel %vm1064, %v1049, %v1062
    %v1071 = vsel %vm1068, %v1070, %v1063
    %vm1072 = vcmask 1043458
    %v1073 = vsel %vm1072, %v1045, %v1059
    %vm1074 = vcmask 1045504
    %v1075 = vsel %vm1074, %v1061, %v1060
    %vm1076 = vcmask 1045506
    %v1077 = vsel %vm1076, %v1073, %v1075
    %v1078 = vrot.slane %v1077, 2
    %v1079 = vsel %vm1072, %v1049, %v1062
    %v1080 = vsel %vm1076, %v1079, %v1063
    %v1081 = vrot.slane %v1080, 2
    %v1082 = vsel %vm1066, %v1045, %v1059
    %v1083 = vsel %vm1064, %v1060, %v1061
    %v1084 = vsel %vm1068, %v1083, %v1082
    %v1085 = vrot.slane %v1084, 4
    %v1086 = vsel %vm1066, %v1049, %v1062
    %v1087 = vsel %vm1068, %v1063, %v1086
    %v1088 = vrot.slane %v1087, 4
    %v1089 = vsel %vm1074, %v1059, %v1045
    %v1090 = vsel %vm1072, %v1060, %v1061
    %v1091 = vsel %vm1076, %v1090, %v1089
    %v1092 = vrot.slane %v1091, 6
    %v1093 = vsel %vm1074, %v1062, %v1049
    %v1094 = vsel %vm1076, %v1063, %v1093
    %v1095 = vrot.slane %v1094, 6
    %1104 = vst [vmem:[#allocation2] sm:$0xff] %v1069
    %vm1105 = vmor %vm1072, %vm1064
    %vm1106 = vcmask 128004
    %vm1107 = vmor %vm1106, %vm1105
    %1108 = vst.msk [vmem:[#allocation2 + $0x8] sm:$0x3f] %vm1107, %v1071
    %1109 = vst [vmem:[#allocation2 + $0xe] sm:$0xff] %v1078
    %1110 = vst.msk [vmem:[#allocation2 + $0x16] sm:$0x3f] %vm1107, %v1081
    %1111 = vst [vmem:[#allocation2 + $0x1c] sm:$0xff] %v1085
    %1112 = vst.msk [vmem:[#allocation2 + $0x24] sm:$0x3f] %vm1107, %v1088
    %1113 = vst [vmem:[#allocation2 + $0x2a] sm:$0xff] %v1092
    %1114 = vst.msk [vmem:[#allocation2 + $0x32] sm:$0x3f] %vm1107, %v1095
    // Predicated region
    $region18: #{tpu_custom_call.1} parent=1 // pred_check
      _
    $region19: #{tpu_custom_call.1} parent=1 // pred_check_branch
      %1116 = sbr.rel (0) target = $region21
    $region20: #{tpu_custom_call.1} parent=1 // pred_region
      %1118 = vsyncadd [#allocation3], 672
      %s1119 = sshll.u32 [#allocation2], 4
      %s1120 = int_to_ptr.vmem [resolvable:$true] %s1119
      %s1121 = sshll.u32 %s4, 4
      %s1122 = int_to_ptr.hbm [resolvable:$true] %s1121
      %1127 = dma.vmem_to_hbm [thread:$0]  %s1120, 224, %s1122, [#allocation3], 224, 224, 14
    $region21: #{tpu_custom_call.1} parent=1 // pred_fallthru
      _
    // Predicated region
    $region22: #{tpu_custom_call.1} parent=1 // pred_check
      _
    $region23: #{tpu_custom_call.1} parent=1 // pred_check_branch
      %1129 = sbr.rel (0) target = $region25
    $region24: #{tpu_custom_call.1} parent=1 // pred_region
      %1131 = dma.done [#allocation3], 896
    $region25: #{tpu_custom_call.1} parent=1 // pred_fallthru
      _
    %1132 = vsyncpa [#allocation3], 1

</llo_original>
